<compile_context>
chip_gen: v7x
topology: tpu7x:2x2x1
jax: 0.10.0
libtpu: 0.0.40
codegen_flags: <defaults>
</compile_context>

<pallas_src>
import functools

import jax
import jax.numpy as jnp
from jax.experimental import pallas as pl
from jax.experimental.pallas import tpu as pltpu


def _round_up(n, m):
    return ((n + m - 1) // m) * m


def convgru_kernel(masks_ref, xh_ref, w1t_ref, w2t_ref, b_ref, out_ref,
                   *, H, W, k, compute_dtype):
    """One batch element per grid step.

    masks_ref : (k*k, 1, HW) f32   0/1 halo masks per tap
    xh_ref    : (1, Cp, HW)  f32   stacked [h, x, zero-pad] channels, flattened
    w1t_ref   : (3*Ch, k*k*Cp)     fused [update | reset | out(x-only)] weights
    w2t_ref   : (Ch, k*k*Chp)      out-gate weights acting on (h * reset)
    b_ref     : (3*Ch, 1)    f32   fused biases
    out_ref   : (1, Ch, HW)        new hidden state (lane-dense store)
    """
    ch = out_ref.shape[1]
    HW = out_ref.shape[2]
    chp = w2t_ref.shape[1] // (k * k)
    p = k // 2

    xh = xh_ref[0]                                   # (Cp, HW), f32

    def shifted_taps(src):
        """im2col along sublanes: k*k rolled+masked copies of `src`."""
        pieces = []
        for ki in range(k):
            for kj in range(k):
                t = ki * k + kj
                s = (ki - p) * W + (kj - p)          # flat read-ahead offset
                if s == 0:
                    piece = src                      # center tap: no roll/mask
                else:
                    piece = pltpu.roll(src, shift=(-s) % HW, axis=1)
                    piece = piece * masks_ref[t]     # (1, HW) halo mask
                pieces.append(piece.astype(compute_dtype))
        return jnp.concatenate(pieces, axis=0)

    # ---- conv 1: fused [update | reset | out(x-part)] over stacked [h, x] ---
    col1 = shifted_taps(xh)                          # (k*k*Cp, HW)
    acc1 = jnp.dot(w1t_ref[...], col1,
                   preferred_element_type=jnp.float32) + b_ref[...]  # (3Ch,HW)

    update = jax.nn.sigmoid(acc1[0:ch, :])
    reset = jax.nn.sigmoid(acc1[ch:2 * ch, :])
    o_x = acc1[2 * ch:3 * ch, :]                     # out-gate x-part + bias

    # ---- conv 2: out-gate h-part over (h * reset) ---------------------------
    h = xh[0:ch, :]                                  # aligned slice (h first)
    hr = h * reset
    if chp != ch:                                    # pad channels to mult. of 8
        hr = jnp.concatenate(
            [hr, jnp.zeros((chp - ch, HW), hr.dtype)], axis=0)
    col2 = shifted_taps(hr)                          # (k*k*Chp, HW)
    o = jnp.tanh(o_x + jnp.dot(w2t_ref[...], col2,
                               preferred_element_type=jnp.float32))

    # ---- GRU state update ---------------------------------------------------
    new_h = h * (1.0 - update) + o * update          # (Ch, HW)
    out_ref[0] = new_h.astype(out_ref.dtype)


@functools.partial(jax.jit, static_argnames=("compute_dtype",))
def _conv_gru_forward(x, prev_state, params, compute_dtype=jnp.float32):
    """x: (B, Cin, H, W); prev_state: (B, Ch, H, W). Returns (B, Ch, H, W)."""
    B, Cin, H, W = x.shape
    Ch = prev_state.shape[1]
    wu, wr, wo = params["w_update"], params["w_reset"], params["w_out"]
    k = wu.shape[0]
    p = k // 2
    HW = H * W
    C = Cin + Ch
    Cp = _round_up(C, 8)
    Chp = _round_up(Ch, 8)

    # Activations: NCHW -> (B, Cp, H*W), channel order [h, x, zero-pad].
    # (reshape is free; no transpose, no spatial pad.)
    xh = jnp.concatenate(
        [prev_state.reshape(B, Ch, HW),
         x.reshape(B, Cin, HW),
         jnp.zeros((B, Cp - C, HW), x.dtype)], axis=1)

    # Fused first-conv weight (3*Ch, k*k*Cp); per-tap rows ordered [h, x, pad].
    def reorder_pad(w):                              # (k,k,C,Ch) HWIO
        return jnp.concatenate(
            [w[:, :, Cin:, :], w[:, :, :Cin, :],
             jnp.zeros((k, k, Cp - C, Ch), w.dtype)], axis=2)

    wu_r = reorder_pad(wu)
    wr_r = reorder_pad(wr)
    wo_x = jnp.concatenate(                          # x-part only; h-block = 0
        [jnp.zeros((k, k, Ch, Ch), wo.dtype), wo[:, :, :Cin, :],
         jnp.zeros((k, k, Cp - C, Ch), wo.dtype)], axis=2)
    w1 = jnp.concatenate([wu_r, wr_r, wo_x], axis=3)       # (k,k,Cp,3Ch)
    w1t = w1.reshape(k * k * Cp, 3 * Ch).T.astype(compute_dtype)

    # Second-conv weight (Ch, k*k*Chp): out-gate acting on (h * reset).
    woh = jnp.concatenate(
        [wo[:, :, Cin:, :], jnp.zeros((k, k, Chp - Ch, Ch), wo.dtype)], axis=2)
    w2t = woh.reshape(k * k * Chp, Ch).T.astype(compute_dtype)

    b_all = jnp.concatenate(
        [params["b_update"], params["b_reset"], params["b_out"]])
    b_all = b_all.reshape(3 * Ch, 1).astype(jnp.float32)

    # 0/1 halo masks for the k*k shifted taps: (k*k, 1, HW).
    qi = jnp.arange(HW, dtype=jnp.int32) // W
    qj = jnp.arange(HW, dtype=jnp.int32) % W
    d = jnp.arange(k, dtype=jnp.int32) - p
    ok_i = (qi[None, :] + d[:, None] >= 0) & (qi[None, :] + d[:, None] < H)
    ok_j = (qj[None, :] + d[:, None] >= 0) & (qj[None, :] + d[:, None] < W)
    masks = (ok_i[:, None, :] & ok_j[None, :, :]).astype(jnp.float32)
    masks = masks.reshape(k * k, 1, HW)

    kernel = functools.partial(
        convgru_kernel, H=H, W=W, k=k, compute_dtype=compute_dtype)

    grid_spec = pltpu.PrefetchScalarGridSpec(
        num_scalar_prefetch=0,
        grid=(B,),
        in_specs=[
            pl.BlockSpec((k * k, 1, HW), lambda b: (0, 0, 0)),
            pl.BlockSpec((1, Cp, HW), lambda b: (b, 0, 0)),
            pl.BlockSpec((3 * Ch, k * k * Cp), lambda b: (0, 0)),
            pl.BlockSpec((Ch, k * k * Chp), lambda b: (0, 0)),
            pl.BlockSpec((3 * Ch, 1), lambda b: (0, 0)),
        ],
        out_specs=pl.BlockSpec((1, Ch, HW), lambda b: (b, 0, 0)),
    )

    out = pl.pallas_call(
        kernel,
        grid_spec=grid_spec,
        out_shape=jax.ShapeDtypeStruct((B, Ch, HW), x.dtype),
        compiler_params=pltpu.CompilerParams(
            dimension_semantics=("parallel",),
            vmem_limit_bytes=32 * 1024 * 1024),
    )(masks, xh, w1t, w2t, b_all)

    return out.reshape(B, Ch, H, W)


def conv_gru_forward(x, prev_state, params, hidden_size=None,
                     compute_dtype=jnp.float32):
    """Public entry point; mirrors the module's prev_state=None behavior."""
    if prev_state is None:
        B, _, H, W = x.shape
        prev_state = jnp.zeros((B, hidden_size, H, W), x.dtype)
    return _conv_gru_forward(x, prev_state, params, compute_dtype=compute_dtype)


def make_gate_params(key, cin, ch, k):
    """Mimics nn.init.orthogonal_ on Conv2d(cin+ch, ch, k).weight, bias=0.

    Returns (w_hwio, bias) with w_hwio shape (k, k, cin+ch, ch)."""
    w = jax.nn.initializers.orthogonal()(key, (ch, (cin + ch) * k * k),
                                         jnp.float32)
    w = w.reshape(ch, cin + ch, k, k)                # OIHW (PyTorch layout)
    w = jnp.transpose(w, (2, 3, 1, 0))               # -> HWIO
    b = jnp.zeros((ch,), jnp.float32)
    return w, b


def ref_forward(x_nchw, h_nchw, params):
    """Pure-JAX reference (lax.conv), NCHW in/out, for correctness checking."""
    x = jnp.transpose(x_nchw, (0, 2, 3, 1))
    h = jnp.transpose(h_nchw, (0, 2, 3, 1))

    def conv(inp, w, b):
        y = jax.lax.conv_general_dilated(
            inp, w, (1, 1), "SAME",
            dimension_numbers=("NHWC", "HWIO", "NHWC"))
        return y + b.reshape(1, 1, 1, -1)

    xh = jnp.concatenate([x, h], axis=-1)
    update = jax.nn.sigmoid(conv(xh, params["w_update"], params["b_update"]))
    reset = jax.nn.sigmoid(conv(xh, params["w_reset"], params["b_reset"]))
    xhr = jnp.concatenate([x, h * reset], axis=-1)
    out = jnp.tanh(conv(xhr, params["w_out"], params["b_out"]))
    new_h = h * (1.0 - update) + out * update
    return jnp.transpose(new_h, (0, 3, 1, 2))


if __name__ == "__main__":
    B, Cin, Ch, H, W, K = 2, 4, 8, 16, 16, 3

    key = jax.random.PRNGKey(0)
    kx, kh, ku, kr, ko = jax.random.split(key, 5)

    x = jax.random.normal(kx, (B, Cin, H, W), jnp.float32)
    prev_state = jax.random.normal(kh, (B, Ch, H, W), jnp.float32)

    wu, bu = make_gate_params(ku, Cin, Ch, K)
    wr, br = make_gate_params(kr, Cin, Ch, K)
    wo, bo = make_gate_params(ko, Cin, Ch, K)
    params = dict(w_update=wu, w_reset=wr, w_out=wo,
                  b_update=bu, b_reset=br, b_out=bo)

    new_state = conv_gru_forward(x, prev_state, params,
                                 compute_dtype=jnp.float32)
    new_state = jax.block_until_ready(new_state)

    ref = ref_forward(x, prev_state, params)
    assert new_state.shape == (B, Ch, H, W)
    err = float(jnp.max(jnp.abs(new_state - ref)))
    assert err < 1e-4, err

    print("KERNEL_OK")
</pallas_src>

<mosaic_0001>
module attributes {stable_mosaic.version = 11 : i64} {
  func.func @convgru_kernel(%arg0: i32, %arg1: memref<9x1x256xf32, #tpu.memory_space<vmem>>, %arg2: memref<1x16x256xf32, #tpu.memory_space<vmem>>, %arg3: memref<24x144xf32, #tpu.memory_space<vmem>>, %arg4: memref<8x72xf32, #tpu.memory_space<vmem>>, %arg5: memref<24x1xf32, #tpu.memory_space<vmem>>, %arg6: memref<1x8x256xf32, #tpu.memory_space<vmem>>) attributes {dimension_semantics = [#tpu.dimension_semantics<parallel>], iteration_bounds = array<i64: 2>, scalar_prefetch = 0 : i64, scratch_operands = 0 : i64, tpu.core_type = #tpu.core_type<tc>, window_params = [{pipeline_mode = #tpu.pipeline_mode<synchronous>, transform_indices = @transform_0, window_bounds = array<i64: 9, 1, 256>}, {transform_indices = @transform_1, window_bounds = array<i64: 1, 16, 256>}, {pipeline_mode = #tpu.pipeline_mode<synchronous>, transform_indices = @transform_2, window_bounds = array<i64: 24, 144>}, {pipeline_mode = #tpu.pipeline_mode<synchronous>, transform_indices = @transform_3, window_bounds = array<i64: 8, 72>}, {pipeline_mode = #tpu.pipeline_mode<synchronous>, transform_indices = @transform_4, window_bounds = array<i64: 24, 1>}, {transform_indices = @transform_5, window_bounds = array<i64: 1, 8, 256>}]} {
    %c0 = arith.constant 0 : index
    %c0_0 = arith.constant 0 : index
    %c0_1 = arith.constant 0 : index
    %0 = vector.load %arg2[%c0, %c0_0, %c0_1] : memref<1x16x256xf32, #tpu.memory_space<vmem>>, vector<1x16x256xf32>
    %1 = vector.shape_cast %0 : vector<1x16x256xf32> to vector<16x256xf32>
    %c17_i32 = arith.constant 17 : i32
    %2 = tpu.dynamic_rotate %1 by %c17_i32 dim 1 : vector<16x256xf32>, i32 -> vector<16x256xf32>
    %c0_2 = arith.constant 0 : index
    %c0_3 = arith.constant 0 : index
    %c0_4 = arith.constant 0 : index
    %3 = vector.load %arg1[%c0_2, %c0_3, %c0_4] : memref<9x1x256xf32, #tpu.memory_space<vmem>>, vector<1x1x256xf32>
    %4 = vector.shape_cast %3 : vector<1x1x256xf32> to vector<1x256xf32>
    %5 = vector.broadcast %4 : vector<1x256xf32> to vector<16x256xf32>
    %6 = arith.mulf %2, %5 : vector<16x256xf32>
    %c16_i32 = arith.constant 16 : i32
    %7 = tpu.dynamic_rotate %1 by %c16_i32 dim 1 : vector<16x256xf32>, i32 -> vector<16x256xf32>
    %c1 = arith.constant 1 : index
    %c0_5 = arith.constant 0 : index
    %c0_6 = arith.constant 0 : index
    %8 = vector.load %arg1[%c1, %c0_5, %c0_6] : memref<9x1x256xf32, #tpu.memory_space<vmem>>, vector<1x1x256xf32>
    %9 = vector.shape_cast %8 : vector<1x1x256xf32> to vector<1x256xf32>
    %10 = vector.broadcast %9 : vector<1x256xf32> to vector<16x256xf32>
    %11 = arith.mulf %7, %10 : vector<16x256xf32>
    %c15_i32 = arith.constant 15 : i32
    %12 = tpu.dynamic_rotate %1 by %c15_i32 dim 1 : vector<16x256xf32>, i32 -> vector<16x256xf32>
    %c2 = arith.constant 2 : index
    %c0_7 = arith.constant 0 : index
    %c0_8 = arith.constant 0 : index
    %13 = vector.load %arg1[%c2, %c0_7, %c0_8] : memref<9x1x256xf32, #tpu.memory_space<vmem>>, vector<1x1x256xf32>
    %14 = vector.shape_cast %13 : vector<1x1x256xf32> to vector<1x256xf32>
    %15 = vector.broadcast %14 : vector<1x256xf32> to vector<16x256xf32>
    %16 = arith.mulf %12, %15 : vector<16x256xf32>
    %c1_i32 = arith.constant 1 : i32
    %17 = tpu.dynamic_rotate %1 by %c1_i32 dim 1 : vector<16x256xf32>, i32 -> vector<16x256xf32>
    %c3 = arith.constant 3 : index
    %c0_9 = arith.constant 0 : index
    %c0_10 = arith.constant 0 : index
    %18 = vector.load %arg1[%c3, %c0_9, %c0_10] : memref<9x1x256xf32, #tpu.memory_space<vmem>>, vector<1x1x256xf32>
    %19 = vector.shape_cast %18 : vector<1x1x256xf32> to vector<1x256xf32>
    %20 = vector.broadcast %19 : vector<1x256xf32> to vector<16x256xf32>
    %21 = arith.mulf %17, %20 : vector<16x256xf32>
    %c255_i32 = arith.constant 255 : i32
    %22 = tpu.dynamic_rotate %1 by %c255_i32 dim 1 : vector<16x256xf32>, i32 -> vector<16x256xf32>
    %c5 = arith.constant 5 : index
    %c0_11 = arith.constant 0 : index
    %c0_12 = arith.constant 0 : index
    %23 = vector.load %arg1[%c5, %c0_11, %c0_12] : memref<9x1x256xf32, #tpu.memory_space<vmem>>, vector<1x1x256xf32>
    %24 = vector.shape_cast %23 : vector<1x1x256xf32> to vector<1x256xf32>
    %25 = vector.broadcast %24 : vector<1x256xf32> to vector<16x256xf32>
    %26 = arith.mulf %22, %25 : vector<16x256xf32>
    %c241_i32 = arith.constant 241 : i32
    %27 = tpu.dynamic_rotate %1 by %c241_i32 dim 1 : vector<16x256xf32>, i32 -> vector<16x256xf32>
    %c6 = arith.constant 6 : index
    %c0_13 = arith.constant 0 : index
    %c0_14 = arith.constant 0 : index
    %28 = vector.load %arg1[%c6, %c0_13, %c0_14] : memref<9x1x256xf32, #tpu.memory_space<vmem>>, vector<1x1x256xf32>
    %29 = vector.shape_cast %28 : vector<1x1x256xf32> to vector<1x256xf32>
    %30 = vector.broadcast %29 : vector<1x256xf32> to vector<16x256xf32>
    %31 = arith.mulf %27, %30 : vector<16x256xf32>
    %c240_i32 = arith.constant 240 : i32
    %32 = tpu.dynamic_rotate %1 by %c240_i32 dim 1 : vector<16x256xf32>, i32 -> vector<16x256xf32>
    %c7 = arith.constant 7 : index
    %c0_15 = arith.constant 0 : index
    %c0_16 = arith.constant 0 : index
    %33 = vector.load %arg1[%c7, %c0_15, %c0_16] : memref<9x1x256xf32, #tpu.memory_space<vmem>>, vector<1x1x256xf32>
    %34 = vector.shape_cast %33 : vector<1x1x256xf32> to vector<1x256xf32>
    %35 = vector.broadcast %34 : vector<1x256xf32> to vector<16x256xf32>
    %36 = arith.mulf %32, %35 : vector<16x256xf32>
    %c239_i32 = arith.constant 239 : i32
    %37 = tpu.dynamic_rotate %1 by %c239_i32 dim 1 : vector<16x256xf32>, i32 -> vector<16x256xf32>
    %c8 = arith.constant 8 : index
    %c0_17 = arith.constant 0 : index
    %c0_18 = arith.constant 0 : index
    %38 = vector.load %arg1[%c8, %c0_17, %c0_18] : memref<9x1x256xf32, #tpu.memory_space<vmem>>, vector<1x1x256xf32>
    %39 = vector.shape_cast %38 : vector<1x1x256xf32> to vector<1x256xf32>
    %40 = vector.broadcast %39 : vector<1x256xf32> to vector<16x256xf32>
    %41 = arith.mulf %37, %40 : vector<16x256xf32>
    %42 = tpu.concatenate %6, %11, %16, %21, %1, %26, %31, %36, %41 in 0 : vector<16x256xf32>, vector<16x256xf32>, vector<16x256xf32>, vector<16x256xf32>, vector<16x256xf32>, vector<16x256xf32>, vector<16x256xf32>, vector<16x256xf32>, vector<16x256xf32> -> vector<144x256xf32>
    %c0_19 = arith.constant 0 : index
    %c0_20 = arith.constant 0 : index
    %43 = vector.load %arg3[%c0_19, %c0_20] : memref<24x144xf32, #tpu.memory_space<vmem>>, vector<24x144xf32>
    %cst = arith.constant dense<0.000000e+00> : vector<24x256xf32>
    %44 = tpu.matmul %43, %42, %cst {dimension_numbers = #tpu.dot_dimension_numbers<[1], [0], [0], [1], [0, 0, 1, 1], [], []>} : vector<24x144xf32>, vector<144x256xf32>, vector<24x256xf32> -> vector<24x256xf32>
    %c0_21 = arith.constant 0 : index
    %c0_22 = arith.constant 0 : index
    %45 = vector.load %arg5[%c0_21, %c0_22] : memref<24x1xf32, #tpu.memory_space<vmem>>, vector<24x1xf32>
    %46 = vector.broadcast %45 : vector<24x1xf32> to vector<24x256xf32>
    %47 = arith.addf %44, %46 : vector<24x256xf32>
    %48 = vector.extract_strided_slice %47 {offsets = [0, 0], sizes = [8, 256], strides = [1, 1]} : vector<24x256xf32> to vector<8x256xf32>
    %49 = arith.negf %48 : vector<8x256xf32>
    %50 = math.exp %49 : vector<8x256xf32>
    %cst_23 = arith.constant 1.000000e+00 : f32
    %51 = vector.broadcast %cst_23 : f32 to vector<8x256xf32>
    %52 = arith.addf %51, %50 : vector<8x256xf32>
    %53 = arith.divf %51, %52 : vector<8x256xf32>
    %54 = vector.extract_strided_slice %47 {offsets = [8, 0], sizes = [8, 256], strides = [1, 1]} : vector<24x256xf32> to vector<8x256xf32>
    %55 = arith.negf %54 : vector<8x256xf32>
    %56 = math.exp %55 : vector<8x256xf32>
    %cst_24 = arith.constant 1.000000e+00 : f32
    %57 = vector.broadcast %cst_24 : f32 to vector<8x256xf32>
    %58 = arith.addf %57, %56 : vector<8x256xf32>
    %59 = arith.divf %57, %58 : vector<8x256xf32>
    %60 = vector.extract_strided_slice %47 {offsets = [16, 0], sizes = [8, 256], strides = [1, 1]} : vector<24x256xf32> to vector<8x256xf32>
    %61 = vector.extract_strided_slice %1 {offsets = [0, 0], sizes = [8, 256], strides = [1, 1]} : vector<16x256xf32> to vector<8x256xf32>
    %62 = arith.mulf %61, %59 : vector<8x256xf32>
    %c17_i32_25 = arith.constant 17 : i32
    %63 = tpu.dynamic_rotate %62 by %c17_i32_25 dim 1 : vector<8x256xf32>, i32 -> vector<8x256xf32>
    %c0_26 = arith.constant 0 : index
    %c0_27 = arith.constant 0 : index
    %c0_28 = arith.constant 0 : index
    %64 = vector.load %arg1[%c0_26, %c0_27, %c0_28] : memref<9x1x256xf32, #tpu.memory_space<vmem>>, vector<1x1x256xf32>
    %65 = vector.shape_cast %64 : vector<1x1x256xf32> to vector<1x256xf32>
    %66 = vector.broadcast %65 : vector<1x256xf32> to vector<8x256xf32>
    %67 = arith.mulf %63, %66 : vector<8x256xf32>
    %c16_i32_29 = arith.constant 16 : i32
    %68 = tpu.dynamic_rotate %62 by %c16_i32_29 dim 1 : vector<8x256xf32>, i32 -> vector<8x256xf32>
    %c1_30 = arith.constant 1 : index
    %c0_31 = arith.constant 0 : index
    %c0_32 = arith.constant 0 : index
    %69 = vector.load %arg1[%c1_30, %c0_31, %c0_32] : memref<9x1x256xf32, #tpu.memory_space<vmem>>, vector<1x1x256xf32>
    %70 = vector.shape_cast %69 : vector<1x1x256xf32> to vector<1x256xf32>
    %71 = vector.broadcast %70 : vector<1x256xf32> to vector<8x256xf32>
    %72 = arith.mulf %68, %71 : vector<8x256xf32>
    %c15_i32_33 = arith.constant 15 : i32
    %73 = tpu.dynamic_rotate %62 by %c15_i32_33 dim 1 : vector<8x256xf32>, i32 -> vector<8x256xf32>
    %c2_34 = arith.constant 2 : index
    %c0_35 = arith.constant 0 : index
    %c0_36 = arith.constant 0 : index
    %74 = vector.load %arg1[%c2_34, %c0_35, %c0_36] : memref<9x1x256xf32, #tpu.memory_space<vmem>>, vector<1x1x256xf32>
    %75 = vector.shape_cast %74 : vector<1x1x256xf32> to vector<1x256xf32>
    %76 = vector.broadcast %75 : vector<1x256xf32> to vector<8x256xf32>
    %77 = arith.mulf %73, %76 : vector<8x256xf32>
    %c1_i32_37 = arith.constant 1 : i32
    %78 = tpu.dynamic_rotate %62 by %c1_i32_37 dim 1 : vector<8x256xf32>, i32 -> vector<8x256xf32>
    %c3_38 = arith.constant 3 : index
    %c0_39 = arith.constant 0 : index
    %c0_40 = arith.constant 0 : index
    %79 = vector.load %arg1[%c3_38, %c0_39, %c0_40] : memref<9x1x256xf32, #tpu.memory_space<vmem>>, vector<1x1x256xf32>
    %80 = vector.shape_cast %79 : vector<1x1x256xf32> to vector<1x256xf32>
    %81 = vector.broadcast %80 : vector<1x256xf32> to vector<8x256xf32>
    %82 = arith.mulf %78, %81 : vector<8x256xf32>
    %c255_i32_41 = arith.constant 255 : i32
    %83 = tpu.dynamic_rotate %62 by %c255_i32_41 dim 1 : vector<8x256xf32>, i32 -> vector<8x256xf32>
    %c5_42 = arith.constant 5 : index
    %c0_43 = arith.constant 0 : index
    %c0_44 = arith.constant 0 : index
    %84 = vector.load %arg1[%c5_42, %c0_43, %c0_44] : memref<9x1x256xf32, #tpu.memory_space<vmem>>, vector<1x1x256xf32>
    %85 = vector.shape_cast %84 : vector<1x1x256xf32> to vector<1x256xf32>
    %86 = vector.broadcast %85 : vector<1x256xf32> to vector<8x256xf32>
    %87 = arith.mulf %83, %86 : vector<8x256xf32>
    %c241_i32_45 = arith.constant 241 : i32
    %88 = tpu.dynamic_rotate %62 by %c241_i32_45 dim 1 : vector<8x256xf32>, i32 -> vector<8x256xf32>
    %c6_46 = arith.constant 6 : index
    %c0_47 = arith.constant 0 : index
    %c0_48 = arith.constant 0 : index
    %89 = vector.load %arg1[%c6_46, %c0_47, %c0_48] : memref<9x1x256xf32, #tpu.memory_space<vmem>>, vector<1x1x256xf32>
    %90 = vector.shape_cast %89 : vector<1x1x256xf32> to vector<1x256xf32>
    %91 = vector.broadcast %90 : vector<1x256xf32> to vector<8x256xf32>
    %92 = arith.mulf %88, %91 : vector<8x256xf32>
    %c240_i32_49 = arith.constant 240 : i32
    %93 = tpu.dynamic_rotate %62 by %c240_i32_49 dim 1 : vector<8x256xf32>, i32 -> vector<8x256xf32>
    %c7_50 = arith.constant 7 : index
    %c0_51 = arith.constant 0 : index
    %c0_52 = arith.constant 0 : index
    %94 = vector.load %arg1[%c7_50, %c0_51, %c0_52] : memref<9x1x256xf32, #tpu.memory_space<vmem>>, vector<1x1x256xf32>
    %95 = vector.shape_cast %94 : vector<1x1x256xf32> to vector<1x256xf32>
    %96 = vector.broadcast %95 : vector<1x256xf32> to vector<8x256xf32>
    %97 = arith.mulf %93, %96 : vector<8x256xf32>
    %c239_i32_53 = arith.constant 239 : i32
    %98 = tpu.dynamic_rotate %62 by %c239_i32_53 dim 1 : vector<8x256xf32>, i32 -> vector<8x256xf32>
    %c8_54 = arith.constant 8 : index
    %c0_55 = arith.constant 0 : index
    %c0_56 = arith.constant 0 : index
    %99 = vector.load %arg1[%c8_54, %c0_55, %c0_56] : memref<9x1x256xf32, #tpu.memory_space<vmem>>, vector<1x1x256xf32>
    %100 = vector.shape_cast %99 : vector<1x1x256xf32> to vector<1x256xf32>
    %101 = vector.broadcast %100 : vector<1x256xf32> to vector<8x256xf32>
    %102 = arith.mulf %98, %101 : vector<8x256xf32>
    %103 = tpu.concatenate %67, %72, %77, %82, %62, %87, %92, %97, %102 in 0 : vector<8x256xf32>, vector<8x256xf32>, vector<8x256xf32>, vector<8x256xf32>, vector<8x256xf32>, vector<8x256xf32>, vector<8x256xf32>, vector<8x256xf32>, vector<8x256xf32> -> vector<72x256xf32>
    %c0_57 = arith.constant 0 : index
    %c0_58 = arith.constant 0 : index
    %104 = vector.load %arg4[%c0_57, %c0_58] : memref<8x72xf32, #tpu.memory_space<vmem>>, vector<8x72xf32>
    %cst_59 = arith.constant dense<0.000000e+00> : vector<8x256xf32>
    %105 = tpu.matmul %104, %103, %cst_59 {dimension_numbers = #tpu.dot_dimension_numbers<[1], [0], [0], [1], [0, 0, 1, 1], [], []>} : vector<8x72xf32>, vector<72x256xf32>, vector<8x256xf32> -> vector<8x256xf32>
    %106 = arith.addf %60, %105 : vector<8x256xf32>
    %107 = math.tanh %106 : vector<8x256xf32>
    %cst_60 = arith.constant 1.000000e+00 : f32
    %108 = vector.broadcast %cst_60 : f32 to vector<8x256xf32>
    %109 = arith.subf %108, %53 : vector<8x256xf32>
    %110 = arith.mulf %61, %109 : vector<8x256xf32>
    %111 = arith.mulf %107, %53 : vector<8x256xf32>
    %112 = arith.addf %110, %111 : vector<8x256xf32>
    %c0_61 = arith.constant 0 : index
    %c0_62 = arith.constant 0 : index
    %c0_63 = arith.constant 0 : index
    %113 = vector.load %arg6[%c0_61, %c0_62, %c0_63] : memref<1x8x256xf32, #tpu.memory_space<vmem>>, vector<1x8x256xf32>
    %114 = vector.shape_cast %113 : vector<1x8x256xf32> to vector<8x256xf32>
    %115 = vector.shape_cast %112 : vector<8x256xf32> to vector<1x8x256xf32>
    tpu.vector_store %arg6[%c0_61, %c0_62, %c0_63], %115 {strides = array<i32>} : memref<1x8x256xf32, #tpu.memory_space<vmem>>, vector<1x8x256xf32>,
    return
  }
  func.func @transform_0(%arg0: i32) -> (i32, i32, i32) {
    %c0_i32 = arith.constant 0 : i32
    %c0_i32_0 = arith.constant 0 : i32
    %c0_i32_1 = arith.constant 0 : i32
    %c0_i32_2 = arith.constant 0 : i32
    return %c0_i32, %c0_i32_0, %c0_i32_1 : i32, i32, i32
  }
  func.func @transform_1(%arg0: i32) -> (i32, i32, i32) {
    %c0_i32 = arith.constant 0 : i32
    %c0_i32_0 = arith.constant 0 : i32
    %c0_i32_1 = arith.constant 0 : i32
    return %arg0, %c0_i32, %c0_i32_0 : i32, i32, i32
  }
  func.func @transform_2(%arg0: i32) -> (i32, i32) {
    %c0_i32 = arith.constant 0 : i32
    %c0_i32_0 = arith.constant 0 : i32
    %c0_i32_1 = arith.constant 0 : i32
    return %c0_i32, %c0_i32_0 : i32, i32
  }
  func.func @transform_3(%arg0: i32) -> (i32, i32) {
    %c0_i32 = arith.constant 0 : i32
    %c0_i32_0 = arith.constant 0 : i32
    %c0_i32_1 = arith.constant 0 : i32
    return %c0_i32, %c0_i32_0 : i32, i32
  }
  func.func @transform_4(%arg0: i32) -> (i32, i32) {
    %c0_i32 = arith.constant 0 : i32
    %c0_i32_0 = arith.constant 0 : i32
    %c0_i32_1 = arith.constant 0 : i32
    return %c0_i32, %c0_i32_0 : i32, i32
  }
  func.func @transform_5(%arg0: i32) -> (i32, i32, i32) {
    %c0_i32 = arith.constant 0 : i32
    %c0_i32_0 = arith.constant 0 : i32
    %c0_i32_1 = arith.constant 0 : i32
    return %arg0, %c0_i32, %c0_i32_0 : i32, i32, i32
  }
}

</mosaic_0001>

<llo_original>
// kernel: _conv_gru_forward.1
$region0: #{_conv_gru_forward.1}
  #allocation0 [shape = 'u32[]', space=smem, size = 0x4, offset = 0x4, fixed_abs, tag = 'smem constant byte address 0x4 - core index']
  #allocation1 [shape = 'u32[144,128]{1,0:T(1,128)}', space=vmem, size = 0x12000, scoped, tag = 'internal scratch']
  %s0 = inlined_call_operand.vmem [shape: f32[9,1,256], index: 0, kind: input, shape index: {}]
  %s1 = inlined_call_operand.vmem [shape: f32[2,16,256], index: 1, kind: input, shape index: {}]
  %s2 = inlined_call_operand.vmem [shape: f32[24,144], index: 2, kind: input, shape index: {}]
  %s3 = inlined_call_operand.vmem [shape: f32[8,72], index: 3, kind: input, shape index: {}]
  %s4 = inlined_call_operand.vmem [shape: f32[24,1], index: 4, kind: input, shape index: {}]
  %s5 = inlined_call_operand.vmem [shape: f32[2,8,256], index: 5, kind: output, shape index: {}]
  %s6 = sld [smem:[#allocation0]]
  $region53: #{_conv_gru_forward.1} parent=0
    _
  %s8 = ssub.s32 1, %s6
  %s9 = scalar_select 0, %s8, %s6
  loop: start=0, step=1, limit=4
  $region2: #{_conv_gru_forward.1} parent=0 // loop_pre_header
    _
  $region3: #{_conv_gru_forward.1} parent=0 // loop_header
    %s11 = sphi 0, %s15
    %p12 = scmp.ge.s32.totalorder %s11, 4
    %s19 = sphi 0, %s19
    %s21 = sphi 0, %s19
    %s22 = sphi 0, %s21
    %s36 = sphi 0, %s22
    %s42 = sphi 0, %s44
    %s45 = sphi 0, %s42
    %s46 = sphi 0, %s45
    %s62 = sphi 0, %s46
    %s66 = sphi 0, %s66
    %s68 = sphi 0, %s66
    %s69 = sphi 0, %s68
    %s83 = sphi 0, %s69
    %s87 = sphi 0, %s87
    %s89 = sphi 0, %s87
    %s90 = sphi 0, %s89
    %s104 = sphi 0, %s90
    %s108 = sphi 0, %s108
    %s110 = sphi 0, %s108
    %s111 = sphi 0, %s110
    %s125 = sphi 0, %s111
    %s131 = sphi 0, %s133
    %s134 = sphi 0, %s131
    %s135 = sphi 0, %s134
    %s151 = sphi 0, %s135
  $region4: #{_conv_gru_forward.1} parent=0 // loop_header_branch
    %14 = sbr.rel (%p12) target = $region8
  $region5: #{_conv_gru_forward.1} parent=0 // loop_body
    %s16 = ssub.s32 %s11, 1
    %s17 = ssub.s32 %s11, 2
    %s18 = sadd.s32 %s11, 1
    %s20 = sadd.s32 %s19, 1
    %p23 = scmp.eq.s32.totalorder %s11, 1
    %p24 = scmp.ne.s32.totalorder %s19, %s21
    %p25 = scmp.eq.s32.totalorder %s11, 0
    %p26 = por %p24, %p25
    %p27 = scmp.ne.s32.totalorder %s19, %s21
    %p28 = scmp.eq.s32.totalorder %s16, 1
    %p29 = por %p27, %p28
    %p30 = scmp.ne.s32.totalorder %s21, %s22
    %p31 = scmp.eq.s32.totalorder %s16, 0
    %p32 = por %p30, %p31
    %p33 = scmp.ne.s32.totalorder %s21, %s22
    %p34 = scmp.eq.s32.totalorder %s17, 1
    %p35 = por %p33, %p34
    %p37 = scmp.ne.s32.totalorder %s22, %s36
    %p38 = scmp.eq.s32.totalorder %s17, 0
    %p39 = por %p37, %p38
    %s40 = ssub.s32 %s11, %s18
    %p41 = scmp.eq.s32.totalorder %s40, 0
    %s43 = sadd.s32 %s42, 1
    %s44 = scalar_select %p41, %s42, %s43
    %p47 = pneg %p41
    %p48 = scmp.eq.s32.totalorder %s11, 1
    %p49 = por %p47, %p48
    %p50 = scmp.ne.s32.totalorder %s42, %s45
    %p51 = scmp.eq.s32.totalorder %s11, 0
    %p52 = por %p50, %p51
    %p53 = scmp.ne.s32.totalorder %s42, %s45
    %p54 = scmp.eq.s32.totalorder %s16, 1
    %p55 = por %p53, %p54
    %p56 = scmp.ne.s32.totalorder %s45, %s46
    %p57 = scmp.eq.s32.totalorder %s16, 0
    %p58 = por %p56, %p57
    %p59 = scmp.ne.s32.totalorder %s45, %s46
    %p60 = scmp.eq.s32.totalorder %s17, 1
    %p61 = por %p59, %p60
    %p63 = scmp.ne.s32.totalorder %s46, %s62
    %p64 = scmp.eq.s32.totalorder %s17, 0
    %p65 = por %p63, %p64
    %s67 = sadd.s32 %s66, 1
    %p70 = scmp.eq.s32.totalorder %s11, 1
    %p71 = scmp.ne.s32.totalorder %s66, %s68
    %p72 = scmp.eq.s32.totalorder %s11, 0
    %p73 = por %p71, %p72
    %p74 = scmp.ne.s32.totalorder %s66, %s68
    %p75 = scmp.eq.s32.totalorder %s16, 1
    %p76 = por %p74, %p75
    %p77 = scmp.ne.s32.totalorder %s68, %s69
    %p78 = scmp.eq.s32.totalorder %s16, 0
    %p79 = por %p77, %p78
    %p80 = scmp.ne.s32.totalorder %s68, %s69
    %p81 = scmp.eq.s32.totalorder %s17, 1
    %p82 = por %p80, %p81
    %p84 = scmp.ne.s32.totalorder %s69, %s83
    %p85 = scmp.eq.s32.totalorder %s17, 0
    %p86 = por %p84, %p85
    %s88 = sadd.s32 %s87, 1
    %p91 = scmp.eq.s32.totalorder %s11, 1
    %p92 = scmp.ne.s32.totalorder %s87, %s89
    %p93 = scmp.eq.s32.totalorder %s11, 0
    %p94 = por %p92, %p93
    %p95 = scmp.ne.s32.totalorder %s87, %s89
    %p96 = scmp.eq.s32.totalorder %s16, 1
    %p97 = por %p95, %p96
    %p98 = scmp.ne.s32.totalorder %s89, %s90
    %p99 = scmp.eq.s32.totalorder %s16, 0
    %p100 = por %p98, %p99
    %p101 = scmp.ne.s32.totalorder %s89, %s90
    %p102 = scmp.eq.s32.totalorder %s17, 1
    %p103 = por %p101, %p102
    %p105 = scmp.ne.s32.totalorder %s90, %s104
    %p106 = scmp.eq.s32.totalorder %s17, 0
    %p107 = por %p105, %p106
    %s109 = sadd.s32 %s108, 1
    %p112 = scmp.eq.s32.totalorder %s11, 1
    %p113 = scmp.ne.s32.totalorder %s108, %s110
    %p114 = scmp.eq.s32.totalorder %s11, 0
    %p115 = por %p113, %p114
    %p116 = scmp.ne.s32.totalorder %s108, %s110
    %p117 = scmp.eq.s32.totalorder %s16, 1
    %p118 = por %p116, %p117
    %p119 = scmp.ne.s32.totalorder %s110, %s111
    %p120 = scmp.eq.s32.totalorder %s16, 0
    %p121 = por %p119, %p120
    %p122 = scmp.ne.s32.totalorder %s110, %s111
    %p123 = scmp.eq.s32.totalorder %s17, 1
    %p124 = por %p122, %p123
    %p126 = scmp.ne.s32.totalorder %s111, %s125
    %p127 = scmp.eq.s32.totalorder %s17, 0
    %p128 = por %p126, %p127
    %s129 = ssub.s32 %s11, %s18
    %p130 = scmp.eq.s32.totalorder %s129, 0
    %s132 = sadd.s32 %s131, 1
    %s133 = scalar_select %p130, %s131, %s132
    %p136 = pneg %p130
    %p137 = scmp.eq.s32.totalorder %s11, 1
    %p138 = por %p136, %p137
    %p139 = scmp.ne.s32.totalorder %s131, %s134
    %p140 = scmp.eq.s32.totalorder %s11, 0
    %p141 = por %p139, %p140
    %p142 = scmp.ne.s32.totalorder %s131, %s134
    %p143 = scmp.eq.s32.totalorder %s16, 1
    %p144 = por %p142, %p143
    %p145 = scmp.ne.s32.totalorder %s134, %s135
    %p146 = scmp.eq.s32.totalorder %s16, 0
    %p147 = por %p145, %p146
    %p148 = scmp.ne.s32.totalorder %s134, %s135
    %p149 = scmp.eq.s32.totalorder %s17, 1
    %p150 = por %p148, %p149
    %p152 = scmp.ne.s32.totalorder %s135, %s151
    %p153 = scmp.eq.s32.totalorder %s17, 0
    %p154 = por %p152, %p153
    %p155 = scmp.le.s32.totalorder 1, %s11
    %p156 = scmp.lt.s32.totalorder %s11, 3
    %p157 = pnand %p155, %p156
    %p158 = pneg %p157
    // Predicated region
    $region9: #{_conv_gru_forward.1} parent=5 // pred_check
      _
    $region10: #{_conv_gru_forward.1} parent=5 // pred_check_branch
      %160 = sbr.rel (%p157) target = $region12
    $region11: #{_conv_gru_forward.1} parent=5 // pred_region
      %s161 = ssub.s32 %s11, 1
      // Predicated region
      $region13: #{_conv_gru_forward.1} parent=11 // pred_check
        %p162 = pneg %p32
      $region14: #{_conv_gru_forward.1} parent=11 // pred_check_branch
        %164 = sbr.rel (%p162) target = $region16
      $region15: #{_conv_gru_forward.1} parent=11 // pred_region
        _
      $region16: #{_conv_gru_forward.1} parent=11 // pred_fallthru
        _
      // Predicated region
      $region17: #{_conv_gru_forward.1} parent=11 // pred_check
        %p165 = pneg %p79
      $region18: #{_conv_gru_forward.1} parent=11 // pred_check_branch
        %167 = sbr.rel (%p165) target = $region20
      $region19: #{_conv_gru_forward.1} parent=11 // pred_region
        _
      $region20: #{_conv_gru_forward.1} parent=11 // pred_fallthru
        _
      // Predicated region
      $region21: #{_conv_gru_forward.1} parent=11 // pred_check
        %p168 = pneg %p100
      $region22: #{_conv_gru_forward.1} parent=11 // pred_check_branch
        %170 = sbr.rel (%p168) target = $region24
      $region23: #{_conv_gru_forward.1} parent=11 // pred_region
        _
      $region24: #{_conv_gru_forward.1} parent=11 // pred_fallthru
        _
      // Predicated region
      $region25: #{_conv_gru_forward.1} parent=11 // pred_check
        %p171 = pneg %p121
      $region26: #{_conv_gru_forward.1} parent=11 // pred_check_branch
        %173 = sbr.rel (%p171) target = $region28
      $region27: #{_conv_gru_forward.1} parent=11 // pred_region
        _
      $region28: #{_conv_gru_forward.1} parent=11 // pred_fallthru
        _
    $region12: #{_conv_gru_forward.1} parent=5 // pred_fallthru
      _
    %p174 = scmp.lt.s32.totalorder %s11, 2
    // Predicated region
    $region29: #{_conv_gru_forward.1} parent=5 // pred_check
      %p175 = pneg %p174
    $region30: #{_conv_gru_forward.1} parent=5 // pred_check_branch
      %177 = sbr.rel (%p175) target = $region32
    $region31: #{_conv_gru_forward.1} parent=5 // pred_region
      // Predicated region
      $region33: #{_conv_gru_forward.1} parent=31 // pred_check
        %p178 = pneg %p52
      $region34: #{_conv_gru_forward.1} parent=31 // pred_check_branch
        %180 = sbr.rel (%p178) target = $region36
      $region35: #{_conv_gru_forward.1} parent=31 // pred_region
        %p181 = scmp.lt.s32.totalorder %s11, 1
        %s182 = scalar_select %p181, %s11, 1
        %s183 = smul.addr %s182, 4
        %s184 = smul.addr %s183, 8
        %s185 = scalar_lea.vmem %s1, %s184
      $region36: #{_conv_gru_forward.1} parent=31 // pred_fallthru
        _
    $region32: #{_conv_gru_forward.1} parent=5 // pred_fallthru
      _
    %p186 = scmp.le.s32.totalorder 1, %s11
    %p187 = scmp.lt.s32.totalorder %s11, 3
    %p188 = pnand %p186, %p187
    %p189 = pneg %p188
    // Predicated region
    $region37: #{_conv_gru_forward.1} parent=5 // pred_check
      _
    $region38: #{_conv_gru_forward.1} parent=5 // pred_check_branch
      %191 = sbr.rel (%p188) target = $region40
    $region39: #{_conv_gru_forward.1} parent=5 // pred_region
      %s192 = ssub.s32 %s11, 1
      %p193 = pneg %p32
      %p194 = pneg %p29
      %p195 = scmp.lt.s32.totalorder %s16, 1
      %s196 = scalar_select %p195, %s16, 1
      %s197 = smul.addr %s196, 4
      %s198 = smul.addr %s197, 8
      %s199 = scalar_lea.vmem %s1, %s198
      %p200 = pneg %p58
      %p201 = pneg %p55
      %p202 = pneg %p79
      %p203 = pneg %p76
      %p204 = pneg %p100
      %p205 = pneg %p97
      %p206 = pneg %p121
      %p207 = pneg %p118
      %p208 = pneg %p147
      %p209 = pneg %p144
      %p210 = scmp.lt.s32.totalorder %s16, 1
      %s211 = scalar_select %p210, %s16, 1
      %s212 = smul.addr %s211, 2
      %s213 = smul.addr %s212, 8
      %s214 = scalar_lea.vmem %s5, %s213
      %p215 = scmp.lt.s32.totalorder %s16, 1
      %s216 = scalar_select %p215, %s16, 1
      %s217 = smul.addr %s216, 4
      %s218 = smul.addr %s217, 8
      %s219 = scalar_lea.vmem %s1, %s218
      %p220 = scmp.lt.s32.totalorder %s16, 1
      %s221 = scalar_select %p220, %s16, 1
      %s222 = smul.addr %s221, 2
      %s223 = smul.addr %s222, 8
      %s224 = scalar_lea.vmem %s5, %s223
      %v225 = vld [vmem:[%s219] sm:$0xff]
      %v226 = vld [vmem:[%s219 + $0x8] sm:$0xff]
      %v227 = vld [vmem:[%s219 + $0x10] sm:$0xff]
      %v228 = vld [vmem:[%s219 + $0x18] sm:$0xff]
      %229 = vrot.lane.b32.xlu0 %v225, 17
      %v230 = vpop.permute.xlu0 %229
      %231 = vrot.lane.b32.xlu0 %v227, 17
      %v232 = vpop.permute.xlu0 %231
      %233 = vrot.lane.b32.xlu0 %v226, 17
      %v234 = vpop.permute.xlu0 %233
      %235 = vrot.lane.b32.xlu0 %v228, 17
      %v236 = vpop.permute.xlu0 %235
      %v237 = vlaneseq
      %v238 = vand.u32 %v237, 127
      %vm239 = vcmp.lt.s32.totalorder %v238, 17
      %v240 = vsel %vm239, %v230, %v234
      %v241 = vsel %vm239, %v232, %v236
      %v242 = vsel %vm239, %v234, %v230
      %v243 = vsel %vm239, %v236, %v232
      %v244 = vld [vmem:[%s0] sm:$0x3]
      %v246 = vlaneseq
      %v247 = vshrl.u32 %v246, 7
      %v248 = vsub.s32 0, %v247
      %v249 = vrot.slane %v244, %v248
      %v250 = vlaneseq
      %v251 = vshrl.u32 %v250, 7
      %v252 = vsub.s32 1, %v251
      %v253 = vrot.slane %v244, %v252
      %v256 = vmul.f32 %v242, %v249
      %v257 = vmul.f32 %v240, %v253
      %v258 = vmul.f32 %v243, %v249
      %v259 = vmul.f32 %v241, %v253
      %260 = vrot.lane.b32.xlu0 %v225, 16
      %v261 = vpop.permute.xlu0 %260
      %262 = vrot.lane.b32.xlu0 %v227, 16
      %v263 = vpop.permute.xlu0 %262
      %264 = vrot.lane.b32.xlu0 %v226, 16
      %v265 = vpop.permute.xlu0 %264
      %266 = vrot.lane.b32.xlu0 %v228, 16
      %v267 = vpop.permute.xlu0 %266
      %vm268 = vcmp.lt.s32.totalorder %v238, 16
      %v269 = vsel %vm268, %v261, %v265
      %v270 = vsel %vm268, %v263, %v267
      %v271 = vsel %vm268, %v265, %v261
      %v272 = vsel %vm268, %v267, %v263
      %s273 = scalar_lea.vmem %s0, 2
      %v274 = vld [vmem:[%s273] sm:$0x3]
      %v276 = vlaneseq
      %v277 = vshrl.u32 %v276, 7
      %v278 = vsub.s32 0, %v277
      %v279 = vrot.slane %v274, %v278
      %v280 = vlaneseq
      %v281 = vshrl.u32 %v280, 7
      %v282 = vsub.s32 1, %v281
      %v283 = vrot.slane %v274, %v282
      %v286 = vmul.f32 %v271, %v279
      %v287 = vmul.f32 %v269, %v283
      %v288 = vmul.f32 %v272, %v279
      %v289 = vmul.f32 %v270, %v283
      %290 = vrot.lane.b32.xlu0 %v225, 15
      %v291 = vpop.permute.xlu0 %290
      %292 = vrot.lane.b32.xlu0 %v227, 15
      %v293 = vpop.permute.xlu0 %292
      %294 = vrot.lane.b32.xlu0 %v226, 15
      %v295 = vpop.permute.xlu0 %294
      %296 = vrot.lane.b32.xlu0 %v228, 15
      %v297 = vpop.permute.xlu0 %296
      %vm298 = vcmp.lt.s32.totalorder %v238, 15
      %v299 = vsel %vm298, %v291, %v295
      %v300 = vsel %vm298, %v293, %v297
      %v301 = vsel %vm298, %v295, %v291
      %v302 = vsel %vm298, %v297, %v293
      %s303 = scalar_lea.vmem %s0, 4
      %v304 = vld [vmem:[%s303] sm:$0x3]
      %v306 = vlaneseq
      %v307 = vshrl.u32 %v306, 7
      %v308 = vsub.s32 0, %v307
      %v309 = vrot.slane %v304, %v308
      %v310 = vlaneseq
      %v311 = vshrl.u32 %v310, 7
      %v312 = vsub.s32 1, %v311
      %v313 = vrot.slane %v304, %v312
      %v316 = vmul.f32 %v301, %v309
      %v317 = vmul.f32 %v299, %v313
      %v318 = vmul.f32 %v302, %v309
      %v319 = vmul.f32 %v300, %v313
      %320 = vrot.lane.b32.xlu0 %v225, 1
      %v321 = vpop.permute.xlu0 %320
      %322 = vrot.lane.b32.xlu0 %v227, 1
      %v323 = vpop.permute.xlu0 %322
      %324 = vrot.lane.b32.xlu0 %v226, 1
      %v325 = vpop.permute.xlu0 %324
      %326 = vrot.lane.b32.xlu0 %v228, 1
      %v327 = vpop.permute.xlu0 %326
      %vm328 = vcmp.lt.s32.totalorder %v238, 1
      %v329 = vsel %vm328, %v321, %v325
      %v330 = vsel %vm328, %v323, %v327
      %v331 = vsel %vm328, %v325, %v321
      %v332 = vsel %vm328, %v327, %v323
      %s333 = scalar_lea.vmem %s0, 6
      %v334 = vld [vmem:[%s333] sm:$0x3]
      %v336 = vlaneseq
      %v337 = vshrl.u32 %v336, 7
      %v338 = vsub.s32 0, %v337
      %v339 = vrot.slane %v334, %v338
      %v340 = vlaneseq
      %v341 = vshrl.u32 %v340, 7
      %v342 = vsub.s32 1, %v341
      %v343 = vrot.slane %v334, %v342
      %v346 = vmul.f32 %v331, %v339
      %v347 = vmul.f32 %v329, %v343
      %v348 = vmul.f32 %v332, %v339
      %v349 = vmul.f32 %v330, %v343
      %350 = vrot.lane.b32.xlu0 %v225, 127
      %v351 = vpop.permute.xlu0 %350
      %352 = vrot.lane.b32.xlu0 %v227, 127
      %v353 = vpop.permute.xlu0 %352
      %354 = vrot.lane.b32.xlu0 %v226, 127
      %v355 = vpop.permute.xlu0 %354
      %356 = vrot.lane.b32.xlu0 %v228, 127
      %v357 = vpop.permute.xlu0 %356
      %vm358 = vcmp.lt.s32.totalorder %v238, 127
      %v359 = vsel %vm358, %v351, %v355
      %v360 = vsel %vm358, %v353, %v357
      %v361 = vsel %vm358, %v355, %v351
      %v362 = vsel %vm358, %v357, %v353
      %s363 = scalar_lea.vmem %s0, 10
      %v364 = vld [vmem:[%s363] sm:$0x3]
      %v366 = vlaneseq
      %v367 = vshrl.u32 %v366, 7
      %v368 = vsub.s32 0, %v367
      %v369 = vrot.slane %v364, %v368
      %v370 = vlaneseq
      %v371 = vshrl.u32 %v370, 7
      %v372 = vsub.s32 1, %v371
      %v373 = vrot.slane %v364, %v372
      %v376 = vmul.f32 %v359, %v369
      %v377 = vmul.f32 %v361, %v373
      %v378 = vmul.f32 %v360, %v369
      %v379 = vmul.f32 %v362, %v373
      %380 = vrot.lane.b32.xlu0 %v225, 113
      %v381 = vpop.permute.xlu0 %380
      %382 = vrot.lane.b32.xlu0 %v227, 113
      %v383 = vpop.permute.xlu0 %382
      %384 = vrot.lane.b32.xlu0 %v226, 113
      %v385 = vpop.permute.xlu0 %384
      %386 = vrot.lane.b32.xlu0 %v228, 113
      %v387 = vpop.permute.xlu0 %386
      %vm388 = vcmp.lt.s32.totalorder %v238, 113
      %v389 = vsel %vm388, %v381, %v385
      %v390 = vsel %vm388, %v383, %v387
      %v391 = vsel %vm388, %v385, %v381
      %v392 = vsel %vm388, %v387, %v383
      %s393 = scalar_lea.vmem %s0, 12
      %v394 = vld [vmem:[%s393] sm:$0x3]
      %v396 = vlaneseq
      %v397 = vshrl.u32 %v396, 7
      %v398 = vsub.s32 0, %v397
      %v399 = vrot.slane %v394, %v398
      %v400 = vlaneseq
      %v401 = vshrl.u32 %v400, 7
      %v402 = vsub.s32 1, %v401
      %v403 = vrot.slane %v394, %v402
      %v406 = vmul.f32 %v389, %v399
      %v407 = vmul.f32 %v391, %v403
      %v408 = vmul.f32 %v390, %v399
      %v409 = vmul.f32 %v392, %v403
      %410 = vrot.lane.b32.xlu0 %v225, 112
      %v411 = vpop.permute.xlu0 %410
      %412 = vrot.lane.b32.xlu0 %v227, 112
      %v413 = vpop.permute.xlu0 %412
      %414 = vrot.lane.b32.xlu0 %v226, 112
      %v415 = vpop.permute.xlu0 %414
      %416 = vrot.lane.b32.xlu0 %v228, 112
      %v417 = vpop.permute.xlu0 %416
      %vm418 = vcmp.lt.s32.totalorder %v238, 112
      %v419 = vsel %vm418, %v411, %v415
      %v420 = vsel %vm418, %v413, %v417
      %v421 = vsel %vm418, %v415, %v411
      %v422 = vsel %vm418, %v417, %v413
      %s423 = scalar_lea.vmem %s0, 14
      %v424 = vld [vmem:[%s423] sm:$0x3]
      %v426 = vlaneseq
      %v427 = vshrl.u32 %v426, 7
      %v428 = vsub.s32 0, %v427
      %v429 = vrot.slane %v424, %v428
      %v430 = vlaneseq
      %v431 = vshrl.u32 %v430, 7
      %v432 = vsub.s32 1, %v431
      %v433 = vrot.slane %v424, %v432
      %v436 = vmul.f32 %v419, %v429
      %v437 = vmul.f32 %v421, %v433
      %v438 = vmul.f32 %v420, %v429
      %v439 = vmul.f32 %v422, %v433
      %440 = vrot.lane.b32.xlu0 %v225, 111
      %v441 = vpop.permute.xlu0 %440
      %442 = vrot.lane.b32.xlu0 %v227, 111
      %v443 = vpop.permute.xlu0 %442
      %444 = vrot.lane.b32.xlu0 %v226, 111
      %v445 = vpop.permute.xlu0 %444
      %446 = vrot.lane.b32.xlu0 %v228, 111
      %v447 = vpop.permute.xlu0 %446
      %vm448 = vcmp.lt.s32.totalorder %v238, 111
      %v449 = vsel %vm448, %v441, %v445
      %v450 = vsel %vm448, %v443, %v447
      %v451 = vsel %vm448, %v445, %v441
      %v452 = vsel %vm448, %v447, %v443
      %s453 = scalar_lea.vmem %s0, 16
      %v454 = vld [vmem:[%s453] sm:$0x3]
      %v456 = vlaneseq
      %v457 = vshrl.u32 %v456, 7
      %v458 = vsub.s32 0, %v457
      %v459 = vrot.slane %v454, %v458
      %v460 = vlaneseq
      %v461 = vshrl.u32 %v460, 7
      %v462 = vsub.s32 1, %v461
      %v463 = vrot.slane %v454, %v462
      %v466 = vmul.f32 %v449, %v459
      %v467 = vmul.f32 %v451, %v463
      %v468 = vmul.f32 %v450, %v459
      %v469 = vmul.f32 %v452, %v463
      %v470 = vld [vmem:[%s2] sm:$0xff]
      %v471 = vld [vmem:[%s2 + $0x8] sm:$0xff]
      %v472 = vld [vmem:[%s2 + $0x10] sm:$0xff]
      %v473 = vld [vmem:[%s2 + $0x18] sm:$0xff]
      %v474 = vld [vmem:[%s2 + $0x20] sm:$0xff]
      %v475 = vld [vmem:[%s2 + $0x28] sm:$0xff]
      %v476 = vld [vmem:[%s4] sm:$0xff]
      %v477 = vld [vmem:[%s4 + $0x8] sm:$0xff]
      %v478 = vld [vmem:[%s4 + $0x10] sm:$0xff]
      %480 = vset.pattern.permute.xlu0 0
      %481 = vperm.xlu0 %480, %v476
      %v482 = vpop.permute.xlu0 %481
      %485 = vset.pattern.permute.xlu0 0
      %486 = vperm.xlu0 %485, %v477
      %v487 = vpop.permute.xlu0 %486
      %490 = vset.pattern.permute.xlu0 0
      %491 = vperm.xlu0 %490, %v478
      %v492 = vpop.permute.xlu0 %491
      %vm494 = vcmask 130048
      %v496 = vsel %vm494, %v471, 0
      %v499 = vsel %vm494, %v473, 0
      %v502 = vsel %vm494, %v475, 0
      %504 = vmatprep.subr.mxu0 %v257
      %505 = vmatpush1.msra.mxu0 %v256
      %506 = vmatprep.subr.mxu0 %v259
      %507 = vmatpush1.msra.mxu0 %v258
      %508 = vmatprep.subr.mxu0 %v287
      %509 = vmatpush1.msra.mxu0 %v286
      %510 = vmatprep.subr.mxu0 %v289
      %511 = vmatpush1.msra.mxu0 %v288
      %512 = vmatprep.subr.mxu0 %v317
      %513 = vmatpush1.msra.mxu0 %v316
      %514 = vmatprep.subr.mxu0 %v319
      %515 = vmatpush1.msra.mxu0 %v318
      %516 = vmatprep.subr.mxu0 %v347
      %517 = vmatpush1.msra.mxu0 %v346
      %518 = vmatprep.subr.mxu0 %v349
      %519 = vmatpush1.msra.mxu0 %v348
      %520 = vmatprep.subr.mxu0 %v226
      %521 = vmatpush1.msra.mxu0 %v225
      %522 = vmatprep.subr.mxu0 %v228
      %523 = vmatpush1.msra.mxu0 %v227
      %524 = vmatprep.subr.mxu0 %v377
      %525 = vmatpush1.msra.mxu0 %v376
      %526 = vmatprep.subr.mxu0 %v379
      %527 = vmatpush1.msra.mxu0 %v378
      %528 = vmatprep.subr.mxu0 %v407
      %529 = vmatpush1.msra.mxu0 %v406
      %530 = vmatprep.subr.mxu0 %v409
      %531 = vmatpush1.msra.mxu0 %v408
      %532 = vmatprep.subr.mxu0 %v437
      %533 = vmatpush1.msra.mxu0 %v436
      %534 = vmatprep.subr.mxu0 %v439
      %535 = vmatpush1.msra.mxu0 %v438
      %536 = vmatprep.subr.mxu0 %v467
      %537 = vmatpush1.msra.mxu0 %v466
      %538 = vmatprep.subr.mxu0 %v469
      %539 = vmatpush1.msra.mxu0 %v468
      %540 = vmatprep.subr.mxu0 0.0
      %541 = vmatpush1.msra.mxu0 0.0
      %542 = vmatprep.subr.mxu0 0.0
      %543 = vmatpush1.msra.mxu0 0.0
      %544 = vmatprep.subr.mxu0 0.0
      %545 = vmatpush1.msra.mxu0 0.0
      %546 = vmatprep.subr.mxu0 0.0
      %547 = vmatpush1.msra.mxu0 0.0
      %548 = vmatprep.subr.mxu0 0.0
      %549 = vmatpush1.msra.mxu0 0.0
      %550 = vmatprep.subr.mxu0 0.0
      %551 = vmatpush1.msra.mxu0 0.0
      %552 = vmatprep.subr.mxu0 0.0
      %553 = vmatpush1.msra.mxu0 0.0
      %554 = vmatprep.subr.mxu0 0.0
      %555 = vmatpush1.msra.mxu0 0.0
      %556 = vmatprep.subr.mxu0 0.0
      %557 = vmatpush1.msra.mxu0 0.0
      %558 = vmatprep.subr.mxu0 0.0
      %559 = vmatpush1.msra.mxu0 0.0
      %560 = vmatprep.subr.mxu0 0.0
      %561 = vmatpush1.msra.mxu0 0.0
      %562 = vmatprep.subr.mxu0 0.0
      %563 = vmatpush1.msra.mxu0 0.0
      %564 = vmatprep.subr.mxu0 0.0
      %565 = vmatpush1.msra.mxu0 0.0
      %566 = vmatprep.subr.mxu0 0.0
      %567 = vmatpush1.msra.mxu0 0.0
      %568 = vmatprep.mubr.f32.mxu0 %v496
      %569 = vmatmul.mubr.f32.gmra.mrb[0].mxu0 %v470
      %v570 = vpop.f32.mrb[0].mxu0
      %v571 = vadd.f32 %v482, %v570
      %v572 = vpop.f32.mrb[0].mxu0
      %v573 = vadd.f32 %v482, %v572
      %574 = vmatprep.mubr.f32.mxu0 %v499
      %575 = vmatmul.mubr.f32.gmra.mrb[0].mxu0 %v472
      %v576 = vpop.f32.mrb[0].mxu0
      %v577 = vadd.f32 %v487, %v576
      %v578 = vpop.f32.mrb[0].mxu0
      %v579 = vadd.f32 %v487, %v578
      %580 = vmatprep.mubr.f32.mxu0 %v502
      %581 = vmatmul.mubr.f32.gmra.mrb[0].mxu0 %v474
      %v582 = vpop.f32.mrb[0].mxu0
      %v583 = vadd.f32 %v492, %v582
      %v584 = vpop.f32.mrb[0].mxu0
      %v585 = vadd.f32 %v492, %v584
      %586 = vdwg.mxu0
      %v587 = vxor.u32 %v571, 2147483648
      %v588 = vxor.u32 %v573, 2147483648
      %v589 = vmul.f32 %v587, 1.442695
      %v590 = vpow.pop %v589
      %v591 = vmul.f32 %v588, 1.442695
      %v592 = vpow.pop %v591
      %v593 = vadd.f32 %v590, 1.0
      %v594 = vadd.f32 %v592, 1.0
      %v595 = vrcp.pop %v593
      %v596 = vmul.f32 1.0, %v595
      %v597 = vrcp.pop %v594
      %v598 = vmul.f32 1.0, %v597
      %v599 = vxor.u32 %v577, 2147483648
      %v600 = vxor.u32 %v579, 2147483648
      %v601 = vmul.f32 %v599, 1.442695
      %v602 = vpow.pop %v601
      %v603 = vmul.f32 %v600, 1.442695
      %v604 = vpow.pop %v603
      %v605 = vadd.f32 %v602, 1.0
      %v606 = vadd.f32 %v604, 1.0
      %v607 = vrcp.pop %v605
      %v608 = vmul.f32 1.0, %v607
      %v609 = vrcp.pop %v606
      %v610 = vmul.f32 1.0, %v609
      %v611 = vmul.f32 %v225, %v608
      %v612 = vmul.f32 %v226, %v610
      %613 = vrot.lane.b32.xlu0 %v611, 17
      %v614 = vpop.permute.xlu0 %613
      %615 = vrot.lane.b32.xlu0 %v612, 17
      %v616 = vpop.permute.xlu0 %615
      %v617 = vsel %vm239, %v614, %v616
      %v618 = vsel %vm239, %v616, %v614
      %v619 = vmul.f32 %v618, %v249
      %v620 = vmul.f32 %v617, %v253
      %621 = vrot.lane.b32.xlu0 %v611, 16
      %v622 = vpop.permute.xlu0 %621
      %623 = vrot.lane.b32.xlu0 %v612, 16
      %v624 = vpop.permute.xlu0 %623
      %v625 = vsel %vm268, %v622, %v624
      %v626 = vsel %vm268, %v624, %v622
      %v627 = vmul.f32 %v626, %v279
      %v628 = vmul.f32 %v625, %v283
      %629 = vrot.lane.b32.xlu0 %v611, 15
      %v630 = vpop.permute.xlu0 %629
      %631 = vrot.lane.b32.xlu0 %v612, 15
      %v632 = vpop.permute.xlu0 %631
      %v633 = vsel %vm298, %v630, %v632
      %v634 = vsel %vm298, %v632, %v630
      %v635 = vmul.f32 %v634, %v309
      %v636 = vmul.f32 %v633, %v313
      %637 = vrot.lane.b32.xlu0 %v611, 1
      %v638 = vpop.permute.xlu0 %637
      %639 = vrot.lane.b32.xlu0 %v612, 1
      %v640 = vpop.permute.xlu0 %639
      %v641 = vsel %vm328, %v638, %v640
      %v642 = vsel %vm328, %v640, %v638
      %v643 = vmul.f32 %v642, %v339
      %v644 = vmul.f32 %v641, %v343
      %645 = vrot.lane.b32.xlu0 %v611, 127
      %v646 = vpop.permute.xlu0 %645
      %647 = vrot.lane.b32.xlu0 %v612, 127
      %v648 = vpop.permute.xlu0 %647
      %v649 = vsel %vm358, %v646, %v648
      %v650 = vsel %vm358, %v648, %v646
      %v651 = vmul.f32 %v649, %v369
      %v652 = vmul.f32 %v650, %v373
      %653 = vrot.lane.b32.xlu0 %v611, 113
      %v654 = vpop.permute.xlu0 %653
      %655 = vrot.lane.b32.xlu0 %v612, 113
      %v656 = vpop.permute.xlu0 %655
      %v657 = vsel %vm388, %v654, %v656
      %v658 = vsel %vm388, %v656, %v654
      %v659 = vmul.f32 %v657, %v399
      %v660 = vmul.f32 %v658, %v403
      %661 = vrot.lane.b32.xlu0 %v611, 112
      %v662 = vpop.permute.xlu0 %661
      %663 = vrot.lane.b32.xlu0 %v612, 112
      %v664 = vpop.permute.xlu0 %663
      %v665 = vsel %vm418, %v662, %v664
      %v666 = vsel %vm418, %v664, %v662
      %v667 = vmul.f32 %v665, %v429
      %v668 = vmul.f32 %v666, %v433
      %669 = vrot.lane.b32.xlu0 %v611, 111
      %v670 = vpop.permute.xlu0 %669
      %671 = vrot.lane.b32.xlu0 %v612, 111
      %v672 = vpop.permute.xlu0 %671
      %v673 = vsel %vm448, %v670, %v672
      %v674 = vsel %vm448, %v672, %v670
      %v675 = vmul.f32 %v673, %v459
      %v676 = vmul.f32 %v674, %v463
      %v677 = vld [vmem:[%s3] sm:$0xff]
      %vm678 = vcmask 588800
      %v680 = vsel %vm678, %v677, 0
      %682 = vmatprep.subr.mxu0 %v620
      %683 = vmatpush1.msra.mxu0 %v619
      %684 = vmatprep.subr.mxu0 %v628
      %685 = vmatpush1.msra.mxu0 %v627
      %686 = vmatprep.subr.mxu0 %v636
      %687 = vmatpush1.msra.mxu0 %v635
      %688 = vmatprep.subr.mxu0 %v644
      %689 = vmatpush1.msra.mxu0 %v643
      %690 = vmatprep.subr.mxu0 %v612
      %691 = vmatpush1.msra.mxu0 %v611
      %692 = vmatprep.subr.mxu0 %v652
      %693 = vmatpush1.msra.mxu0 %v651
      %694 = vmatprep.subr.mxu0 %v660
      %695 = vmatpush1.msra.mxu0 %v659
      %696 = vmatprep.subr.mxu0 %v668
      %697 = vmatpush1.msra.mxu0 %v667
      %698 = vmatprep.subr.mxu0 %v676
      %699 = vmatpush1.msra.mxu0 %v675
      %700 = vmatprep.subr.mxu0 0.0
      %701 = vmatpush1.msra.mxu0 0.0
      %702 = vmatprep.subr.mxu0 0.0
      %703 = vmatpush1.msra.mxu0 0.0
      %704 = vmatprep.subr.mxu0 0.0
      %705 = vmatpush1.msra.mxu0 0.0
      %706 = vmatprep.subr.mxu0 0.0
      %707 = vmatpush1.msra.mxu0 0.0
      %708 = vmatprep.subr.mxu0 0.0
      %709 = vmatpush1.msra.mxu0 0.0
      %710 = vmatprep.subr.mxu0 0.0
      %711 = vmatpush1.msra.mxu0 0.0
      %712 = vmatprep.subr.mxu0 0.0
      %713 = vmatpush1.msra.mxu0 0.0
      %714 = vmatprep.subr.mxu0 0.0
      %715 = vmatpush1.msra.mxu0 0.0
      %716 = vmatprep.subr.mxu0 0.0
      %717 = vmatpush1.msra.mxu0 0.0
      %718 = vmatprep.subr.mxu0 0.0
      %719 = vmatpush1.msra.mxu0 0.0
      %720 = vmatprep.subr.mxu0 0.0
      %721 = vmatpush1.msra.mxu0 0.0
      %722 = vmatprep.subr.mxu0 0.0
      %723 = vmatpush1.msra.mxu0 0.0
      %724 = vmatprep.subr.mxu0 0.0
      %725 = vmatpush1.msra.mxu0 0.0
      %726 = vmatprep.subr.mxu0 0.0
      %727 = vmatpush1.msra.mxu0 0.0
      %728 = vmatprep.subr.mxu0 0.0
      %729 = vmatpush1.msra.mxu0 0.0
      %730 = vmatprep.subr.mxu0 0.0
      %731 = vmatpush1.msra.mxu0 0.0
      %732 = vmatprep.subr.mxu0 0.0
      %733 = vmatpush1.msra.mxu0 0.0
      %734 = vmatprep.subr.mxu0 0.0
      %735 = vmatpush1.msra.mxu0 0.0
      %736 = vmatprep.subr.mxu0 0.0
      %737 = vmatpush1.msra.mxu0 0.0
      %738 = vmatprep.subr.mxu0 0.0
      %739 = vmatpush1.msra.mxu0 0.0
      %740 = vmatprep.subr.mxu0 0.0
      %741 = vmatpush1.msra.mxu0 0.0
      %742 = vmatprep.subr.mxu0 0.0
      %743 = vmatpush1.msra.mxu0 0.0
      %744 = vmatprep.subr.mxu0 0.0
      %745 = vmatpush1.msra.mxu0 0.0
      %746 = vmatprep.mubr.f32.mxu0 0.0
      %747 = vmatmul.mubr.f32.gmra.mrb[0].mxu0 %v680
      %v748 = vpop.f32.mrb[0].mxu0
      %v749 = vadd.f32 0.0, %v748
      %v750 = vpop.f32.mrb[0].mxu0
      %v751 = vadd.f32 0.0, %v750
      %752 = vdwg.mxu0
      %v753 = vadd.f32 %v583, %v749
      %v754 = vadd.f32 %v585, %v751
      %v755 = vtanh.pop %v753
      %v756 = vtanh.pop %v754
      %v757 = vsub.f32 1.0, %v596
      %v758 = vsub.f32 1.0, %v598
      %v759 = vmul.f32 %v225, %v757
      %v760 = vmul.f32 %v226, %v758
      %v761 = vmul.f32 %v755, %v596
      %v762 = vmul.f32 %v756, %v598
      %v763 = vadd.f32 %v759, %v761
      %v764 = vadd.f32 %v760, %v762
      %765 = vst [vmem:[%s224] sm:$0xff] %v763
      %766 = vst [vmem:[%s224 + $0x8] sm:$0xff] %v764
      %p767 = scmp.lt.s32.totalorder %s16, 1
      %s768 = scalar_select %p767, %s16, 1
      %s769 = smul.addr %s768, 2
      %s770 = smul.addr %s769, 8
      %s771 = scalar_lea.vmem %s5, %s770
      // Predicated region
      $region41: #{_conv_gru_forward.1} parent=39 // pred_check
        %p772 = pneg %p144
      $region42: #{_conv_gru_forward.1} parent=39 // pred_check_branch
        %774 = sbr.rel (%p772) target = $region44
      $region43: #{_conv_gru_forward.1} parent=39 // pred_region
        _
      $region44: #{_conv_gru_forward.1} parent=39 // pred_fallthru
        _
    $region40: #{_conv_gru_forward.1} parent=5 // pred_fallthru
      _
    %p775 = scmp.le.s32.totalorder 2, %s11
    // Predicated region
    $region45: #{_conv_gru_forward.1} parent=5 // pred_check
      %p776 = pneg %p775
    $region46: #{_conv_gru_forward.1} parent=5 // pred_check_branch
      %778 = sbr.rel (%p776) target = $region48
    $region47: #{_conv_gru_forward.1} parent=5 // pred_region
      %s779 = ssub.s32 %s11, 2
      // Predicated region
      $region49: #{_conv_gru_forward.1} parent=47 // pred_check
        %p780 = pneg %p150
      $region50: #{_conv_gru_forward.1} parent=47 // pred_check_branch
        %782 = sbr.rel (%p780) target = $region52
      $region51: #{_conv_gru_forward.1} parent=47 // pred_region
        %p783 = scmp.lt.s32.totalorder %s17, 1
        %s784 = scalar_select %p783, %s17, 1
        %s785 = smul.addr %s784, 2
        %s786 = smul.addr %s785, 8
        %s787 = scalar_lea.vmem %s5, %s786
      $region52: #{_conv_gru_forward.1} parent=47 // pred_fallthru
        _
    $region48: #{_conv_gru_forward.1} parent=5 // pred_fallthru
      _
  $region6: #{_conv_gru_forward.1} parent=0 // loop_footer
    %s15 = sadd.s32 1, %s11
  $region7: #{_conv_gru_forward.1} parent=0 // loop_footer_branch
    %10 = sbr.rel target = $region3
  $region8: #{_conv_gru_forward.1} parent=0 // loop_exit
    _

</llo_original>
